<compile_context>
chip_gen: v6e
topology: v6e:2x2x1
jax: 0.10.0
libtpu: 0.0.40
codegen_flags: <defaults>
</compile_context>

<pallas_src>
import jax
import jax.numpy as jnp
from jax.experimental import pallas as pl
from jax.experimental.pallas import tpu as pltpu


def _h_sigmoid_kernel(x_ref, o_ref):
    x = x_ref[...]
    # relu6(x + 3) / 6. Python-float constants are weakly typed, so compute
    # stays in the input dtype (no implicit f32 upconvert for bf16 inputs).
    y = jnp.clip(x + 3.0, 0.0, 6.0) / 6.0
    o_ref[...] = y.astype(o_ref.dtype)


def _h_sigmoid_ref(x: jax.Array) -> jax.Array:
    """Pure-JAX reference / fast path (fused XLA elementwise)."""
    return (jnp.clip(x + 3.0, 0.0, 6.0) / 6.0).astype(x.dtype)


def _round_up(n: int, m: int) -> int:
    return ((n + m - 1) // m) * m


def _num_tensorcores() -> int:
    """Best-effort number of TensorCores per chip (1 on v5e/v6e, 2 on v7x-class)."""
    try:
        info = pltpu.get_tpu_info()
        for attr in ("num_tensorcores", "tensorcores_per_chip",
                     "num_cores", "cores_per_chip"):
            n = getattr(info, attr, None)
            if isinstance(n, int) and n > 0:
                return n
    except Exception:
        pass
    try:
        kind = str(getattr(jax.devices()[0], "device_kind", "")).lower()
        if "v7" in kind:
            return 2
    except Exception:
        pass
    return 1


def _h_sigmoid_pallas(x: jax.Array) -> jax.Array:
    orig_shape = x.shape
    orig_dtype = x.dtype
    total = int(x.size)

    if total == 0:
        return x  # empty tensor: nothing to do

    # Pick the widest lane count (multiple of 128) dividing the element count
    # -> lane-dense, unmasked full-width stores.
    lanes = None
    for cand in (1024, 512, 256, 128):
        if total % cand == 0:
            lanes = cand
            break
    if lanes is None:
        # Odd size: not worth padding an extra HBM pass for an elementwise op.
        return _h_sigmoid_ref(x)

    rows = total // lanes

    # Sublane-packing granularity: 8 rows for 32-bit, 16 for bf16, 32 for int8.
    itemsize = jnp.dtype(orig_dtype).itemsize
    gran = 8 * max(1, 4 // itemsize)
    rows_rounded = _round_up(rows, gran)

    # Byte-budget tile sizing (~2 MiB per tile -> 85%+ of HBM roofline; in+out
    # double buffering ~= 8 MiB of VMEM, safe on v5e/v6e and v7x's 64 MiB).
    TARGET_TILE_BYTES = 2 * 1024 * 1024
    row_bytes = lanes * itemsize
    budget_rows = max(gran, (TARGET_TILE_BYTES // row_bytes) // gran * gran)

    num_tc = _num_tensorcores()
    if num_tc >= 2 and rows > gran:
        # Dual-TC chip: ensure >= 2*num_tc blocks so the "parallel" axis shards
        # across both TensorCores with balanced work.
        split_rows = max(gran, _round_up(pl.cdiv(rows, 2 * num_tc), gran))
        tile_rows = min(budget_rows, split_rows, rows_rounded)
        # Prefer an even block count so neither core gets a whole extra tile.
        grid_n = pl.cdiv(rows, tile_rows)
        if grid_n > 1 and grid_n % 2 == 1:
            tile_rows = max(gran, _round_up(pl.cdiv(rows, grid_n + 1), gran))
    else:
        # Single-TC chip: grid is a serial loop; just take the byte-budget tile.
        tile_rows = min(budget_rows, rows_rounded)

    grid = (pl.cdiv(rows, tile_rows),)

    x2d = x.reshape(rows, lanes)

    out = pl.pallas_call(
        _h_sigmoid_kernel,
        out_shape=jax.ShapeDtypeStruct((rows, lanes), orig_dtype),
        grid=grid,
        in_specs=[pl.BlockSpec((tile_rows, lanes), lambda i: (i, 0))],
        out_specs=pl.BlockSpec((tile_rows, lanes), lambda i: (i, 0)),
        compiler_params=pltpu.CompilerParams(
            dimension_semantics=("parallel",),
            # Explicit scoped-VMEM limit: keeps headroom on v5e (16 MiB default)
            # if the tile byte budget is raised; harmless on v6e/v7x.
            vmem_limit_bytes=32 * 1024 * 1024,
        ),
        cost_estimate=pl.CostEstimate(
            flops=3 * total,
            transcendentals=0,
            bytes_accessed=2 * x.nbytes,
        ),
    )(x2d)

    return out.reshape(orig_shape)


def h_sigmoid(x: jax.Array, *, min_pallas_bytes: int = 256 * 1024) -> jax.Array:
    """Elementwise hard-sigmoid, matching torch: ReLU6(x + 3) / 6."""
    if x.size == 0 or x.nbytes < min_pallas_bytes:
        # Launch + DMA setup overhead dwarfs the op for tiny activations.
        return _h_sigmoid_ref(x)
    return _h_sigmoid_pallas(x)


if __name__ == "__main__":
    key = jax.random.PRNGKey(0)

    # NCHW input, consistent with how MobileNetV3 uses this activation.
    x_small = jax.random.normal(key, (2, 4, 16, 16), dtype=jnp.float32) * 4.0
    ref_small = jnp.clip(x_small + 3.0, 0.0, 6.0) / 6.0

    # Default entry point (hits the small-input fast path for this size).
    y_fast = jax.block_until_ready(h_sigmoid(x_small))
    assert y_fast.shape == x_small.shape and y_fast.dtype == x_small.dtype
    assert jnp.max(jnp.abs(y_fast - ref_small)) < 1e-6

    # Force the Pallas kernel on the same small input (single partial block).
    y_kernel = jax.block_until_ready(h_sigmoid(x_small, min_pallas_bytes=0))
    assert y_kernel.shape == x_small.shape and y_kernel.dtype == x_small.dtype
    assert jnp.max(jnp.abs(y_kernel - ref_small)) < 1e-6

    # Larger activation, lanes=1024, exercises the byte-budget multi-row tile.
    x_big = jax.random.normal(jax.random.PRNGKey(0), (2, 16, 32, 32),
                              dtype=jnp.float32) * 4.0
    ref_big = jnp.clip(x_big + 3.0, 0.0, 6.0) / 6.0
    y_big = jax.block_until_ready(h_sigmoid(x_big, min_pallas_bytes=0))
    assert y_big.shape == x_big.shape and y_big.dtype == x_big.dtype
    assert jnp.max(jnp.abs(y_big - ref_big)) < 1e-6

    # Narrow-lane (lanes=128) case: size only divides 128, byte-budget tiling.
    x_narrow = jax.random.normal(jax.random.PRNGKey(0), (2, 4, 16, 18),
                                 dtype=jnp.float32) * 4.0
    ref_narrow = jnp.clip(x_narrow + 3.0, 0.0, 6.0) / 6.0
    y_narrow = jax.block_until_ready(h_sigmoid(x_narrow, min_pallas_bytes=0))
    assert jnp.max(jnp.abs(y_narrow - ref_narrow)) < 1e-6

    # bf16 case: sublane granularity 16, compute stays in bf16.
    x_bf16 = (jax.random.normal(jax.random.PRNGKey(0), (2, 8, 16, 16),
                                dtype=jnp.float32) * 4.0).astype(jnp.bfloat16)
    ref_bf16 = (jnp.clip(x_bf16 + 3.0, 0.0, 6.0) / 6.0).astype(jnp.bfloat16)
    y_bf16 = jax.block_until_ready(h_sigmoid(x_bf16, min_pallas_bytes=0))
    assert y_bf16.dtype == jnp.bfloat16
    assert jnp.max(jnp.abs(y_bf16.astype(jnp.float32)
                           - ref_bf16.astype(jnp.float32))) < 1e-2

    # Odd total size takes the XLA fallback path.
    x_odd = jax.random.normal(jax.random.PRNGKey(0), (2, 3, 5, 7),
                              dtype=jnp.float32) * 4.0
    ref_odd = jnp.clip(x_odd + 3.0, 0.0, 6.0) / 6.0
    y_odd = jax.block_until_ready(h_sigmoid(x_odd, min_pallas_bytes=0))
    assert jnp.max(jnp.abs(y_odd - ref_odd)) < 1e-6

    print("KERNEL_OK")
</pallas_src>

<mosaic_0001>
module attributes {stable_mosaic.version = 11 : i64} {
  func.func @_h_sigmoid_kernel(%arg0: i32, %arg1: memref<8x1024xf32, #tpu.memory_space<vmem>>, %arg2: memref<8x1024xf32, #tpu.memory_space<vmem>>) attributes {dimension_semantics = [#tpu.dimension_semantics<parallel>], iteration_bounds = array<i64: 1>, scalar_prefetch = 0 : i64, scratch_operands = 0 : i64, tpu.core_type = #tpu.core_type<tc>, window_params = [{transform_indices = @transform_0, window_bounds = array<i64: 8, 1024>}, {transform_indices = @transform_1, window_bounds = array<i64: 8, 1024>}]} {
    %c0 = arith.constant 0 : index
    %c0_0 = arith.constant 0 : index
    %0 = vector.load %arg1[%c0, %c0_0] : memref<8x1024xf32, #tpu.memory_space<vmem>>, vector<8x1024xf32>
    %cst = arith.constant 3.000000e+00 : f32
    %1 = vector.broadcast %cst : f32 to vector<8x1024xf32>
    %2 = arith.addf %0, %1 : vector<8x1024xf32>
    %cst_1 = arith.constant 0.000000e+00 : f32
    %cst_2 = arith.constant 6.000000e+00 : f32
    %3 = vector.broadcast %cst_1 : f32 to vector<8x1024xf32>
    %4 = arith.maximumf %3, %2 : vector<8x1024xf32>
    %5 = vector.broadcast %cst_2 : f32 to vector<8x1024xf32>
    %6 = arith.minimumf %5, %4 : vector<8x1024xf32>
    %cst_3 = arith.constant 6.000000e+00 : f32
    %7 = vector.broadcast %cst_3 : f32 to vector<8x1024xf32>
    %8 = arith.divf %6, %7 : vector<8x1024xf32>
    %c0_4 = arith.constant 0 : index
    %c0_5 = arith.constant 0 : index
    %9 = vector.load %arg2[%c0_4, %c0_5] : memref<8x1024xf32, #tpu.memory_space<vmem>>, vector<8x1024xf32>
    tpu.vector_store %arg2[%c0_4, %c0_5], %8 {strides = array<i32>} : memref<8x1024xf32, #tpu.memory_space<vmem>>, vector<8x1024xf32>,
    return
  }
  func.func @transform_0(%arg0: i32) -> (i32, i32) {
    %c0_i32 = arith.constant 0 : i32
    %c0_i32_0 = arith.constant 0 : i32
    return %arg0, %c0_i32 : i32, i32
  }
  func.func @transform_1(%arg0: i32) -> (i32, i32) {
    %c0_i32 = arith.constant 0 : i32
    %c0_i32_0 = arith.constant 0 : i32
    return %arg0, %c0_i32 : i32, i32
  }
}

</mosaic_0001>

<llo_original>
// kernel: tpu_custom_call.1
$region0: #{tpu_custom_call.1}
  #allocation0 [shape = 'u32[]', space=smem, size = 0x4, offset = 0x4, fixed_abs, tag = 'smem constant byte address 0x4 - core index']
  #allocation1 [shape = 'u32[144,128]{1,0:T(1,128)}', space=vmem, size = 0x12000, scoped, tag = 'internal scratch']
  %s0 = inlined_call_operand.hbm [shape: f32[2,1024], index: 0, kind: input, shape index: {}]
  %s1 = inlined_call_operand.hbm [shape: f32[2,1024], index: 1, kind: output, shape index: {}]
  %s2 = sld [smem:[#allocation0]]
  $region18: #{tpu_custom_call.1} parent=0
    _
  %s4 = ssub.s32 1, %s2
  %s5 = scalar_select 0, %s4, %s2
  $region1: #{tpu_custom_call.1} parent=0
    #allocation2 [shape = 'u8[32768]{0}', space=vmem, size = 0x8000, scoped, tag = 'input window, operand 0, single buffered']
    #allocation3 [shape = 's32[1]{0}', space=sflag, size = 0x4, scoped, tag = 'scoped memory for tpu_custom_call.1']
    #allocation4 [shape = 's32[1]{0}', space=sflag, size = 0x4, scoped, tag = 'scoped memory for tpu_custom_call.1']
    #allocation5 [shape = 'u8[32768]{0}', space=vmem, size = 0x8000, scoped, tag = 'output window, operand 0, single buffered']
    %6 = vsyncpa [#allocation3], 0
    %7 = vsyncpa [#allocation4], 0
    // Predicated region
    $region2: #{tpu_custom_call.1} parent=1 // pred_check
      _
    $region3: #{tpu_custom_call.1} parent=1 // pred_check_branch
      %9 = sbr.rel (0) target = $region5
    $region4: #{tpu_custom_call.1} parent=1 // pred_region
      %s11 = ssub.s32 1024, 256
      %12 = vsyncadd [#allocation3], %s11
      %s13 = sshll.u32 [#allocation2], 4
      %s14 = int_to_ptr.vmem [resolvable:$true] %s13
      %19 = dma.hbm_to_vmem [thread:$0]  %s0, 256, %s14, [#allocation3], 256, 256, 16
    $region5: #{tpu_custom_call.1} parent=1 // pred_fallthru
      _
    // Predicated region
    $region6: #{tpu_custom_call.1} parent=1 // pred_check
      _
    $region7: #{tpu_custom_call.1} parent=1 // pred_check_branch
      %21 = sbr.rel (0) target = $region9
    $region8: #{tpu_custom_call.1} parent=1 // pred_region
      %22 = dma.done [#allocation3], 1024
    $region9: #{tpu_custom_call.1} parent=1 // pred_fallthru
      _
    %v23 = vld [vmem:[#allocation2] sm:$0xff]
    %v24 = vld [vmem:[#allocation2 + $0x8] sm:$0xff]
    %v25 = vld [vmem:[#allocation2 + $0x10] sm:$0xff]
    %v26 = vld [vmem:[#allocation2 + $0x18] sm:$0xff]
    %v27 = vld [vmem:[#allocation2 + $0x20] sm:$0xff]
    %v28 = vld [vmem:[#allocation2 + $0x28] sm:$0xff]
    %v29 = vld [vmem:[#allocation2 + $0x30] sm:$0xff]
    %v30 = vld [vmem:[#allocation2 + $0x38] sm:$0xff]
    %v31 = vadd.f32 %v23, 3.0
    %v32 = vadd.f32 %v24, 3.0
    %v33 = vadd.f32 %v25, 3.0
    %v34 = vadd.f32 %v26, 3.0
    %v35 = vadd.f32 %v27, 3.0
    %v36 = vadd.f32 %v28, 3.0
    %v37 = vadd.f32 %v29, 3.0
    %v38 = vadd.f32 %v30, 3.0
    %v39 = vmax.f32 %v31, 0.0
    %v40 = vmax.f32 %v32, 0.0
    %v41 = vmax.f32 %v33, 0.0
    %v42 = vmax.f32 %v34, 0.0
    %v43 = vmax.f32 %v35, 0.0
    %v44 = vmax.f32 %v36, 0.0
    %v45 = vmax.f32 %v37, 0.0
    %v46 = vmax.f32 %v38, 0.0
    %v47 = vmin.f32 %v39, 6.0
    %v48 = vmin.f32 %v40, 6.0
    %v49 = vmin.f32 %v41, 6.0
    %v50 = vmin.f32 %v42, 6.0
    %v51 = vmin.f32 %v43, 6.0
    %v52 = vmin.f32 %v44, 6.0
    %v53 = vmin.f32 %v45, 6.0
    %v54 = vmin.f32 %v46, 6.0
    %v55 = vrcp.pop 6.0
    %v56 = vmul.f32 %v47, %v55
    %v57 = vmul.f32 %v48, %v55
    %v58 = vmul.f32 %v49, %v55
    %v59 = vmul.f32 %v50, %v55
    %v60 = vmul.f32 %v51, %v55
    %v61 = vmul.f32 %v52, %v55
    %v62 = vmul.f32 %v53, %v55
    %v63 = vmul.f32 %v54, %v55
    %64 = vst [vmem:[#allocation5] sm:$0xff] %v56
    %65 = vst [vmem:[#allocation5 + $0x8] sm:$0xff] %v57
    %66 = vst [vmem:[#allocation5 + $0x10] sm:$0xff] %v58
    %67 = vst [vmem:[#allocation5 + $0x18] sm:$0xff] %v59
    %68 = vst [vmem:[#allocation5 + $0x20] sm:$0xff] %v60
    %69 = vst [vmem:[#allocation5 + $0x28] sm:$0xff] %v61
    %70 = vst [vmem:[#allocation5 + $0x30] sm:$0xff] %v62
    %71 = vst [vmem:[#allocation5 + $0x38] sm:$0xff] %v63
    // Predicated region
    $region10: #{tpu_custom_call.1} parent=1 // pred_check
      _
    $region11: #{tpu_custom_call.1} parent=1 // pred_check_branch
      %73 = sbr.rel (0) target = $region13
    $region12: #{tpu_custom_call.1} parent=1 // pred_region
      %s75 = ssub.s32 1024, 256
      %76 = vsyncadd [#allocation4], %s75
      %s77 = sshll.u32 [#allocation5], 4
      %s78 = int_to_ptr.vmem [resolvable:$true] %s77
      %83 = dma.vmem_to_hbm [thread:$0]  %s78, 256, %s1, [#allocation4], 256, 256, 16
    $region13: #{tpu_custom_call.1} parent=1 // pred_fallthru
      _
    // Predicated region
    $region14: #{tpu_custom_call.1} parent=1 // pred_check
      _
    $region15: #{tpu_custom_call.1} parent=1 // pred_check_branch
      %85 = sbr.rel (0) target = $region17
    $region16: #{tpu_custom_call.1} parent=1 // pred_region
      %86 = dma.done [#allocation4], 1024
    $region17: #{tpu_custom_call.1} parent=1 // pred_fallthru
      _
    %87 = vsyncpa [#allocation3], 1
    %88 = vsyncpa [#allocation4], 1

</llo_original>
